<compile_context>
chip_gen: v6e
topology: v6e:2x2x1
jax: 0.10.0
libtpu: 0.0.40
codegen_flags: <defaults>
</compile_context>

<pallas_src>
import jax
import jax.numpy as jnp
import numpy as np
from jax.experimental import pallas as pl
from jax.experimental.pallas import tpu as pltpu

# Conv2DNet config (nn.Conv2d(3, 16, 7), stride 1, no padding).
C_IN = 3
C_OUT = 16
KH = 7
KW = 7
LANE = 128  # f32 lane-tile width


def _conv2d_kernel(x_ref, w_ref, b_ref, o_ref, patch_ref):
    """One grid step = one batch tile of NB images.

    x_ref:     (NB, H, WC_PAD)         image rows; (W, C_IN) folded into the lane
                                       axis and zero-padded to a full 128-lane tile.
    w_ref:     (KH * WC_PAD, Q)        banded, unrolled conv weight (Q = w_out*C_OUT).
    b_ref:     (1, Q)                  bias tiled across w_out.
    o_ref:     (NB, h_out, Q)          lane-dense output block.
    patch_ref: (NB * h_out, KH * WC_PAD)  VMEM scratch for the band-patch matrix.
    """
    nb, _, wcp = x_ref.shape
    h_out = o_ref.shape[1]

    # Assemble the band-patch matrix: for every image and kernel-row offset kh, copy
    # rows [kh, kh + h_out) into the kh-th 128-lane-aligned column block.  Only KH
    # sublane-axis shifts per image — no lane-misaligned (kh, kw) slicing.
    for b in range(nb):                      # static unroll (nb is small)
        for kh in range(KH):                 # static unroll (7)
            patch_ref[b * h_out:(b + 1) * h_out, kh * wcp:(kh + 1) * wcp] = (
                x_ref[b, kh:kh + h_out, :])

    # Single MXU matmul for the whole tile: (NB*h_out, KH*WC_PAD) @ (KH*WC_PAD, Q).
    acc = jnp.dot(patch_ref[...], w_ref[...], preferred_element_type=jnp.float32)
    acc = acc + b_ref[...]                   # (1, Q) broadcast over rows

    for b in range(nb):
        o_ref[b] = acc[b * h_out:(b + 1) * h_out, :].astype(o_ref.dtype)


def prepare_conv_params(w_oihw, bias, input_hw):
    """One-time parameter setup (kept out of the forward path).

    Unrolls the OIHW conv weight into a width-banded (block-Toeplitz) matrix
      W_band[(kh, jj, cin), (j, o)] = w[o, cin, kh, jj - j]   for 0 <= jj - j < KW
    with the (jj, cin) axis zero-padded to a full 128-lane tile per kh, and tiles
    the bias across output columns so the kernel output is (j, o)-flattened.
    """
    h, w = input_hw
    w_out = w - KW + 1
    wc = w * C_IN
    wcp = pl.cdiv(wc, LANE) * LANE

    w_khwio = jnp.transpose(w_oihw, (2, 3, 1, 0))        # (KH, KW, C_IN, C_OUT)
    w_block = w_khwio.reshape(KH, KW * C_IN, C_OUT)      # (KH, KW*C_IN, C_OUT)

    wband = jnp.zeros((KH, wcp, w_out, C_OUT), w_oihw.dtype)
    for j in range(w_out):                               # static, built once
        wband = wband.at[:, j * C_IN:(j + KW) * C_IN, j, :].set(w_block)
    wband = wband.reshape(KH * wcp, w_out * C_OUT)       # (KH*WC_PAD, Q)

    bias_flat = jnp.tile(bias, w_out).reshape(1, w_out * C_OUT)
    return wband, bias_flat


def conv2d_pallas(x_rows, wband, bias_flat, h_out):
    """x_rows: (N, H, WC_PAD) f32; wband: (KH*WC_PAD, Q); bias_flat: (1, Q)."""
    n, h, wcp = x_rows.shape
    kq, q = wband.shape
    assert kq == KH * wcp

    # Batch tiling: at most 2 grid steps, both "parallel", so v7x's two TensorCores
    # each get a tile; on v5e/v6e (1 TC) this just means large per-step tiles and
    # minimal pipeline overhead.
    nb = max(1, n // 2) if n >= 2 else 1
    g = pl.cdiv(n, nb)
    n_pad = g * nb
    if n_pad != n:
        x_rows = jnp.pad(x_rows, ((0, n_pad - n), (0, 0), (0, 0)))

    y = pl.pallas_call(
        _conv2d_kernel,
        out_shape=jax.ShapeDtypeStruct((n_pad, h_out, q), x_rows.dtype),
        grid_spec=pltpu.PrefetchScalarGridSpec(
            num_scalar_prefetch=0,
            grid=(g,),
            in_specs=[
                pl.BlockSpec((nb, h, wcp), lambda i: (i, 0, 0)),
                pl.BlockSpec((kq, q), lambda i: (0, 0)),      # weights: fetched once
                pl.BlockSpec((1, q), lambda i: (0, 0)),       # bias: fetched once
            ],
            out_specs=pl.BlockSpec((nb, h_out, q), lambda i: (i, 0, 0)),
            scratch_shapes=[pltpu.VMEM((nb * h_out, kq), jnp.float32)],
        ),
        compiler_params=pltpu.CompilerParams(
            dimension_semantics=("parallel",),
            vmem_limit_bytes=32 * 1024 * 1024,
        ),
    )(x_rows, wband, bias_flat)
    return y[:n]


def conv2dnet_forward(x_nchw, wband, bias_flat):
    """PyTorch-equivalent forward: NCHW in, NCHW out (params already preprocessed)."""
    n, c, h, w = x_nchw.shape
    h_out, w_out = h - KH + 1, w - KW + 1
    wc = w * c
    wcp = pl.cdiv(wc, LANE) * LANE
    # NCHW -> (N, H, W*C_IN): channels folded into the lane axis (lane-dense),
    # zero-padded to a full 128-lane tile so every in-kernel store is lane-aligned.
    x_rows = jnp.transpose(x_nchw, (0, 2, 3, 1)).reshape(n, h, wc)
    x_rows = jnp.pad(x_rows, ((0, 0), (0, 0), (0, wcp - wc)))
    y = conv2d_pallas(x_rows, wband, bias_flat, h_out)      # (N, h_out, w_out*C_OUT)
    return y.reshape(n, h_out, w_out, C_OUT).transpose(0, 3, 1, 2)


if __name__ == "__main__":
    key = jax.random.PRNGKey(0)
    k_x, k_w, k_b = jax.random.split(key, 3)

    # Deterministic parameters (PyTorch Conv2d default init: U(-1/sqrt(fan_in), +)).
    fan_in = C_IN * KH * KW
    bound = 1.0 / np.sqrt(fan_in)
    w_oihw = jax.random.uniform(k_w, (C_OUT, C_IN, KH, KW), jnp.float32, -bound, bound)
    bias = jax.random.uniform(k_b, (C_OUT,), jnp.float32, -bound, bound)

    # Input: batch=2, 3 in-channels (required by the module), 16x16 spatial.
    x = jax.random.normal(k_x, (2, 3, 16, 16), jnp.float32)
    n, _, h, w = x.shape

    # One-time parameter setup (weight unroll + bias tiling), outside the jit path.
    wband, bias_flat = prepare_conv_params(w_oihw, bias, (h, w))

    fwd = jax.jit(conv2dnet_forward)
    y = jax.block_until_ready(fwd(x, wband, bias_flat))

    # Reference: XLA convolution with identical semantics to torch's conv2d.
    y_ref = jax.lax.conv_general_dilated(
        x, w_oihw, window_strides=(1, 1), padding="VALID",
        dimension_numbers=("NCHW", "OIHW", "NCHW")) + bias[None, :, None, None]
    np.testing.assert_allclose(np.asarray(y), np.asarray(y_ref), rtol=1e-4, atol=1e-4)
    assert y.shape == (n, C_OUT, h - KH + 1, w - KW + 1)

    print("KERNEL_OK")
</pallas_src>

<mosaic_0001>
module attributes {stable_mosaic.version = 11 : i64} {
  func.func @_conv2d_kernel(%arg0: i32, %arg1: memref<1x16x128xf32, #tpu.memory_space<vmem>>, %arg2: memref<896x160xf32, #tpu.memory_space<vmem>>, %arg3: memref<1x160xf32, #tpu.memory_space<vmem>>, %arg4: memref<1x10x160xf32, #tpu.memory_space<vmem>>, %arg5: memref<10x896xf32, #tpu.memory_space<vmem>>) attributes {dimension_semantics = [#tpu.dimension_semantics<parallel>], iteration_bounds = array<i64: 2>, scalar_prefetch = 0 : i64, scratch_operands = 1 : i64, tpu.core_type = #tpu.core_type<tc>, window_params = [{transform_indices = @transform_0, window_bounds = array<i64: 1, 16, 128>}, {pipeline_mode = #tpu.pipeline_mode<synchronous>, transform_indices = @transform_1, window_bounds = array<i64: 896, 160>}, {pipeline_mode = #tpu.pipeline_mode<synchronous>, transform_indices = @transform_2, window_bounds = array<i64: 1, 160>}, {transform_indices = @transform_3, window_bounds = array<i64: 1, 10, 160>}]} {
    %c0 = arith.constant 0 : index
    %c0_0 = arith.constant 0 : index
    %c0_1 = arith.constant 0 : index
    %0 = vector.load %arg1[%c0, %c0_0, %c0_1] : memref<1x16x128xf32, #tpu.memory_space<vmem>>, vector<1x10x128xf32>
    %1 = vector.shape_cast %0 : vector<1x10x128xf32> to vector<10x128xf32>
    %c0_2 = arith.constant 0 : index
    %c0_3 = arith.constant 0 : index
    %2 = vector.load %arg5[%c0_2, %c0_3] : memref<10x896xf32, #tpu.memory_space<vmem>>, vector<10x128xf32>
    tpu.vector_store %arg5[%c0_2, %c0_3], %1 {strides = array<i32>} : memref<10x896xf32, #tpu.memory_space<vmem>>, vector<10x128xf32>,
    %c0_4 = arith.constant 0 : index
    %c1 = arith.constant 1 : index
    %c0_5 = arith.constant 0 : index
    %3 = vector.load %arg1[%c0_4, %c1, %c0_5] : memref<1x16x128xf32, #tpu.memory_space<vmem>>, vector<1x10x128xf32>
    %4 = vector.shape_cast %3 : vector<1x10x128xf32> to vector<10x128xf32>
    %c0_6 = arith.constant 0 : index
    %c128 = arith.constant 128 : index
    %5 = vector.load %arg5[%c0_6, %c128] : memref<10x896xf32, #tpu.memory_space<vmem>>, vector<10x128xf32>
    tpu.vector_store %arg5[%c0_6, %c128], %4 {strides = array<i32>} : memref<10x896xf32, #tpu.memory_space<vmem>>, vector<10x128xf32>,
    %c0_7 = arith.constant 0 : index
    %c2 = arith.constant 2 : index
    %c0_8 = arith.constant 0 : index
    %6 = vector.load %arg1[%c0_7, %c2, %c0_8] : memref<1x16x128xf32, #tpu.memory_space<vmem>>, vector<1x10x128xf32>
    %7 = vector.shape_cast %6 : vector<1x10x128xf32> to vector<10x128xf32>
    %c0_9 = arith.constant 0 : index
    %c256 = arith.constant 256 : index
    %8 = vector.load %arg5[%c0_9, %c256] : memref<10x896xf32, #tpu.memory_space<vmem>>, vector<10x128xf32>
    tpu.vector_store %arg5[%c0_9, %c256], %7 {strides = array<i32>} : memref<10x896xf32, #tpu.memory_space<vmem>>, vector<10x128xf32>,
    %c0_10 = arith.constant 0 : index
    %c3 = arith.constant 3 : index
    %c0_11 = arith.constant 0 : index
    %9 = vector.load %arg1[%c0_10, %c3, %c0_11] : memref<1x16x128xf32, #tpu.memory_space<vmem>>, vector<1x10x128xf32>
    %10 = vector.shape_cast %9 : vector<1x10x128xf32> to vector<10x128xf32>
    %c0_12 = arith.constant 0 : index
    %c384 = arith.constant 384 : index
    %11 = vector.load %arg5[%c0_12, %c384] : memref<10x896xf32, #tpu.memory_space<vmem>>, vector<10x128xf32>
    tpu.vector_store %arg5[%c0_12, %c384], %10 {strides = array<i32>} : memref<10x896xf32, #tpu.memory_space<vmem>>, vector<10x128xf32>,
    %c0_13 = arith.constant 0 : index
    %c4 = arith.constant 4 : index
    %c0_14 = arith.constant 0 : index
    %12 = vector.load %arg1[%c0_13, %c4, %c0_14] : memref<1x16x128xf32, #tpu.memory_space<vmem>>, vector<1x10x128xf32>
    %13 = vector.shape_cast %12 : vector<1x10x128xf32> to vector<10x128xf32>
    %c0_15 = arith.constant 0 : index
    %c512 = arith.constant 512 : index
    %14 = vector.load %arg5[%c0_15, %c512] : memref<10x896xf32, #tpu.memory_space<vmem>>, vector<10x128xf32>
    tpu.vector_store %arg5[%c0_15, %c512], %13 {strides = array<i32>} : memref<10x896xf32, #tpu.memory_space<vmem>>, vector<10x128xf32>,
    %c0_16 = arith.constant 0 : index
    %c5 = arith.constant 5 : index
    %c0_17 = arith.constant 0 : index
    %15 = vector.load %arg1[%c0_16, %c5, %c0_17] : memref<1x16x128xf32, #tpu.memory_space<vmem>>, vector<1x10x128xf32>
    %16 = vector.shape_cast %15 : vector<1x10x128xf32> to vector<10x128xf32>
    %c0_18 = arith.constant 0 : index
    %c640 = arith.constant 640 : index
    %17 = vector.load %arg5[%c0_18, %c640] : memref<10x896xf32, #tpu.memory_space<vmem>>, vector<10x128xf32>
    tpu.vector_store %arg5[%c0_18, %c640], %16 {strides = array<i32>} : memref<10x896xf32, #tpu.memory_space<vmem>>, vector<10x128xf32>,
    %c0_19 = arith.constant 0 : index
    %c6 = arith.constant 6 : index
    %c0_20 = arith.constant 0 : index
    %18 = vector.load %arg1[%c0_19, %c6, %c0_20] : memref<1x16x128xf32, #tpu.memory_space<vmem>>, vector<1x10x128xf32>
    %19 = vector.shape_cast %18 : vector<1x10x128xf32> to vector<10x128xf32>
    %c0_21 = arith.constant 0 : index
    %c768 = arith.constant 768 : index
    %20 = vector.load %arg5[%c0_21, %c768] : memref<10x896xf32, #tpu.memory_space<vmem>>, vector<10x128xf32>
    tpu.vector_store %arg5[%c0_21, %c768], %19 {strides = array<i32>} : memref<10x896xf32, #tpu.memory_space<vmem>>, vector<10x128xf32>,
    %c0_22 = arith.constant 0 : index
    %c0_23 = arith.constant 0 : index
    %21 = vector.load %arg5[%c0_22, %c0_23] : memref<10x896xf32, #tpu.memory_space<vmem>>, vector<10x896xf32>
    %c0_24 = arith.constant 0 : index
    %c0_25 = arith.constant 0 : index
    %22 = vector.load %arg2[%c0_24, %c0_25] : memref<896x160xf32, #tpu.memory_space<vmem>>, vector<896x160xf32>
    %cst = arith.constant dense<0.000000e+00> : vector<10x160xf32>
    %23 = tpu.matmul %21, %22, %cst {dimension_numbers = #tpu.dot_dimension_numbers<[1], [0], [0], [1], [0, 0, 1, 1], [], []>} : vector<10x896xf32>, vector<896x160xf32>, vector<10x160xf32> -> vector<10x160xf32>
    %c0_26 = arith.constant 0 : index
    %c0_27 = arith.constant 0 : index
    %24 = vector.load %arg3[%c0_26, %c0_27] : memref<1x160xf32, #tpu.memory_space<vmem>>, vector<1x160xf32>
    %25 = vector.broadcast %24 : vector<1x160xf32> to vector<10x160xf32>
    %26 = arith.addf %23, %25 : vector<10x160xf32>
    %c0_28 = arith.constant 0 : index
    %c0_29 = arith.constant 0 : index
    %c0_30 = arith.constant 0 : index
    %27 = vector.load %arg4[%c0_28, %c0_29, %c0_30] : memref<1x10x160xf32, #tpu.memory_space<vmem>>, vector<1x10x160xf32>
    %28 = vector.shape_cast %27 : vector<1x10x160xf32> to vector<10x160xf32>
    %29 = vector.shape_cast %26 : vector<10x160xf32> to vector<1x10x160xf32>
    tpu.vector_store %arg4[%c0_28, %c0_29, %c0_30], %29 {strides = array<i32>} : memref<1x10x160xf32, #tpu.memory_space<vmem>>, vector<1x10x160xf32>,
    return
  }
  func.func @transform_0(%arg0: i32) -> (i32, i32, i32) {
    %c0_i32 = arith.constant 0 : i32
    %c0_i32_0 = arith.constant 0 : i32
    %c0_i32_1 = arith.constant 0 : i32
    return %arg0, %c0_i32, %c0_i32_0 : i32, i32, i32
  }
  func.func @transform_1(%arg0: i32) -> (i32, i32) {
    %c0_i32 = arith.constant 0 : i32
    %c0_i32_0 = arith.constant 0 : i32
    %c0_i32_1 = arith.constant 0 : i32
    return %c0_i32, %c0_i32_0 : i32, i32
  }
  func.func @transform_2(%arg0: i32) -> (i32, i32) {
    %c0_i32 = arith.constant 0 : i32
    %c0_i32_0 = arith.constant 0 : i32
    %c0_i32_1 = arith.constant 0 : i32
    return %c0_i32, %c0_i32_0 : i32, i32
  }
  func.func @transform_3(%arg0: i32) -> (i32, i32, i32) {
    %c0_i32 = arith.constant 0 : i32
    %c0_i32_0 = arith.constant 0 : i32
    %c0_i32_1 = arith.constant 0 : i32
    return %arg0, %c0_i32, %c0_i32_0 : i32, i32, i32
  }
}

</mosaic_0001>

<llo_original>
// kernel: conv2dnet_forward.1
$region0: #{conv2dnet_forward.1}
  #allocation0 [shape = 'u32[]', space=smem, size = 0x4, offset = 0x4, fixed_abs, tag = 'smem constant byte address 0x4 - core index']
  #allocation1 [shape = 'u32[144,128]{1,0:T(1,128)}', space=vmem, size = 0x12000, scoped, tag = 'internal scratch']
  #allocation2 [shape = 'f32[10,896]{1,0:T(8,128)}', space=vmem, size = 0xe000, scoped, tag = 'scratch operand']
  %s0 = inlined_call_operand.vmem [shape: f32[2,16,128], index: 0, kind: input, shape index: {}]
  %s1 = inlined_call_operand.vmem [shape: f32[896,160], index: 1, kind: input, shape index: {}]
  %s2 = inlined_call_operand.vmem [shape: f32[1,160], index: 2, kind: input, shape index: {}]
  %s3 = inlined_call_operand.vmem [shape: f32[2,10,160], index: 3, kind: output, shape index: {}]
  %s4 = sld [smem:[#allocation0]]
  $region45: #{conv2dnet_forward.1} parent=0
    _
  %s6 = ssub.s32 1, %s4
  %s7 = scalar_select 0, %s6, %s4
  loop: start=0, step=1, limit=4
  $region2: #{conv2dnet_forward.1} parent=0 // loop_pre_header
    _
  $region3: #{conv2dnet_forward.1} parent=0 // loop_header
    %s9 = sphi 0, %s13
    %p10 = scmp.ge.s32.totalorder %s9, 4
    %s19 = sphi 0, %s21
    %s22 = sphi 0, %s19
    %s23 = sphi 0, %s22
    %s39 = sphi 0, %s23
    %s43 = sphi 0, %s43
    %s45 = sphi 0, %s43
    %s46 = sphi 0, %s45
    %s60 = sphi 0, %s46
    %s64 = sphi 0, %s64
    %s66 = sphi 0, %s64
    %s67 = sphi 0, %s66
    %s81 = sphi 0, %s67
    %s87 = sphi 0, %s89
    %s90 = sphi 0, %s87
    %s91 = sphi 0, %s90
    %s107 = sphi 0, %s91
  $region4: #{conv2dnet_forward.1} parent=0 // loop_header_branch
    %12 = sbr.rel (%p10) target = $region8
  $region5: #{conv2dnet_forward.1} parent=0 // loop_body
    %s14 = ssub.s32 %s9, 1
    %s15 = ssub.s32 %s9, 2
    %s16 = sadd.s32 %s9, 1
    %s17 = ssub.s32 %s9, %s16
    %p18 = scmp.eq.s32.totalorder %s17, 0
    %s20 = sadd.s32 %s19, 1
    %s21 = scalar_select %p18, %s19, %s20
    %p24 = pneg %p18
    %p25 = scmp.eq.s32.totalorder %s9, 1
    %p26 = por %p24, %p25
    %p27 = scmp.ne.s32.totalorder %s19, %s22
    %p28 = scmp.eq.s32.totalorder %s9, 0
    %p29 = por %p27, %p28
    %p30 = scmp.ne.s32.totalorder %s19, %s22
    %p31 = scmp.eq.s32.totalorder %s14, 1
    %p32 = por %p30, %p31
    %p33 = scmp.ne.s32.totalorder %s22, %s23
    %p34 = scmp.eq.s32.totalorder %s14, 0
    %p35 = por %p33, %p34
    %p36 = scmp.ne.s32.totalorder %s22, %s23
    %p37 = scmp.eq.s32.totalorder %s15, 1
    %p38 = por %p36, %p37
    %p40 = scmp.ne.s32.totalorder %s23, %s39
    %p41 = scmp.eq.s32.totalorder %s15, 0
    %p42 = por %p40, %p41
    %s44 = sadd.s32 %s43, 1
    %p47 = scmp.eq.s32.totalorder %s9, 1
    %p48 = scmp.ne.s32.totalorder %s43, %s45
    %p49 = scmp.eq.s32.totalorder %s9, 0
    %p50 = por %p48, %p49
    %p51 = scmp.ne.s32.totalorder %s43, %s45
    %p52 = scmp.eq.s32.totalorder %s14, 1
    %p53 = por %p51, %p52
    %p54 = scmp.ne.s32.totalorder %s45, %s46
    %p55 = scmp.eq.s32.totalorder %s14, 0
    %p56 = por %p54, %p55
    %p57 = scmp.ne.s32.totalorder %s45, %s46
    %p58 = scmp.eq.s32.totalorder %s15, 1
    %p59 = por %p57, %p58
    %p61 = scmp.ne.s32.totalorder %s46, %s60
    %p62 = scmp.eq.s32.totalorder %s15, 0
    %p63 = por %p61, %p62
    %s65 = sadd.s32 %s64, 1
    %p68 = scmp.eq.s32.totalorder %s9, 1
    %p69 = scmp.ne.s32.totalorder %s64, %s66
    %p70 = scmp.eq.s32.totalorder %s9, 0
    %p71 = por %p69, %p70
    %p72 = scmp.ne.s32.totalorder %s64, %s66
    %p73 = scmp.eq.s32.totalorder %s14, 1
    %p74 = por %p72, %p73
    %p75 = scmp.ne.s32.totalorder %s66, %s67
    %p76 = scmp.eq.s32.totalorder %s14, 0
    %p77 = por %p75, %p76
    %p78 = scmp.ne.s32.totalorder %s66, %s67
    %p79 = scmp.eq.s32.totalorder %s15, 1
    %p80 = por %p78, %p79
    %p82 = scmp.ne.s32.totalorder %s67, %s81
    %p83 = scmp.eq.s32.totalorder %s15, 0
    %p84 = por %p82, %p83
    %s85 = ssub.s32 %s9, %s16
    %p86 = scmp.eq.s32.totalorder %s85, 0
    %s88 = sadd.s32 %s87, 1
    %s89 = scalar_select %p86, %s87, %s88
    %p92 = pneg %p86
    %p93 = scmp.eq.s32.totalorder %s9, 1
    %p94 = por %p92, %p93
    %p95 = scmp.ne.s32.totalorder %s87, %s90
    %p96 = scmp.eq.s32.totalorder %s9, 0
    %p97 = por %p95, %p96
    %p98 = scmp.ne.s32.totalorder %s87, %s90
    %p99 = scmp.eq.s32.totalorder %s14, 1
    %p100 = por %p98, %p99
    %p101 = scmp.ne.s32.totalorder %s90, %s91
    %p102 = scmp.eq.s32.totalorder %s14, 0
    %p103 = por %p101, %p102
    %p104 = scmp.ne.s32.totalorder %s90, %s91
    %p105 = scmp.eq.s32.totalorder %s15, 1
    %p106 = por %p104, %p105
    %p108 = scmp.ne.s32.totalorder %s91, %s107
    %p109 = scmp.eq.s32.totalorder %s15, 0
    %p110 = por %p108, %p109
    %p111 = scmp.le.s32.totalorder 1, %s9
    %p112 = scmp.lt.s32.totalorder %s9, 3
    %p113 = pnand %p111, %p112
    %p114 = pneg %p113
    // Predicated region
    $region9: #{conv2dnet_forward.1} parent=5 // pred_check
      _
    $region10: #{conv2dnet_forward.1} parent=5 // pred_check_branch
      %116 = sbr.rel (%p113) target = $region12
    $region11: #{conv2dnet_forward.1} parent=5 // pred_region
      %s117 = ssub.s32 %s9, 1
      // Predicated region
      $region13: #{conv2dnet_forward.1} parent=11 // pred_check
        %p118 = pneg %p56
      $region14: #{conv2dnet_forward.1} parent=11 // pred_check_branch
        %120 = sbr.rel (%p118) target = $region16
      $region15: #{conv2dnet_forward.1} parent=11 // pred_region
        _
      $region16: #{conv2dnet_forward.1} parent=11 // pred_fallthru
        _
      // Predicated region
      $region17: #{conv2dnet_forward.1} parent=11 // pred_check
        %p121 = pneg %p77
      $region18: #{conv2dnet_forward.1} parent=11 // pred_check_branch
        %123 = sbr.rel (%p121) target = $region20
      $region19: #{conv2dnet_forward.1} parent=11 // pred_region
        _
      $region20: #{conv2dnet_forward.1} parent=11 // pred_fallthru
        _
    $region12: #{conv2dnet_forward.1} parent=5 // pred_fallthru
      _
    %p124 = scmp.lt.s32.totalorder %s9, 2
    // Predicated region
    $region21: #{conv2dnet_forward.1} parent=5 // pred_check
      %p125 = pneg %p124
    $region22: #{conv2dnet_forward.1} parent=5 // pred_check_branch
      %127 = sbr.rel (%p125) target = $region24
    $region23: #{conv2dnet_forward.1} parent=5 // pred_region
      // Predicated region
      $region25: #{conv2dnet_forward.1} parent=23 // pred_check
        %p128 = pneg %p29
      $region26: #{conv2dnet_forward.1} parent=23 // pred_check_branch
        %130 = sbr.rel (%p128) target = $region28
      $region27: #{conv2dnet_forward.1} parent=23 // pred_region
        %p131 = scmp.lt.s32.totalorder %s9, 1
        %s132 = scalar_select %p131, %s9, 1
        %s133 = smul.addr %s132, 2
        %s134 = smul.addr %s133, 8
        %s135 = scalar_lea.vmem %s0, %s134
      $region28: #{conv2dnet_forward.1} parent=23 // pred_fallthru
        _
    $region24: #{conv2dnet_forward.1} parent=5 // pred_fallthru
      _
    %p136 = scmp.le.s32.totalorder 1, %s9
    %p137 = scmp.lt.s32.totalorder %s9, 3
    %p138 = pnand %p136, %p137
    %p139 = pneg %p138
    // Predicated region
    $region29: #{conv2dnet_forward.1} parent=5 // pred_check
      _
    $region30: #{conv2dnet_forward.1} parent=5 // pred_check_branch
      %141 = sbr.rel (%p138) target = $region32
    $region31: #{conv2dnet_forward.1} parent=5 // pred_region
      %s142 = ssub.s32 %s9, 1
      %p143 = scmp.lt.s32.totalorder %s14, 1
      %s144 = scalar_select %p143, %s14, 1
      %s145 = smul.addr %s144, 2
      %s146 = smul.addr %s145, 8
      %s147 = scalar_lea.vmem %s0, %s146
      %p148 = pneg %p35
      %p149 = pneg %p32
      %p150 = pneg %p56
      %p151 = pneg %p53
      %p152 = pneg %p77
      %p153 = pneg %p74
      %p154 = pneg %p103
      %p155 = pneg %p100
      %p156 = scmp.lt.s32.totalorder %s14, 1
      %s157 = scalar_select %p156, %s14, 1
      %s158 = smul.addr %s157, 4
      %s159 = smul.addr %s158, 8
      %s160 = scalar_lea.vmem %s3, %s159
      %p161 = scmp.lt.s32.totalorder %s14, 1
      %s162 = scalar_select %p161, %s14, 1
      %s163 = smul.addr %s162, 2
      %s164 = smul.addr %s163, 8
      %s165 = scalar_lea.vmem %s0, %s164
      %p166 = scmp.lt.s32.totalorder %s14, 1
      %s167 = scalar_select %p166, %s14, 1
      %s168 = smul.addr %s167, 4
      %s169 = smul.addr %s168, 8
      %s170 = scalar_lea.vmem %s3, %s169
      %v171 = vld [vmem:[%s165] sm:$0xff]
      %v172 = vld [vmem:[%s165 + $0x8] sm:$0x3]
      %173 = vst [vmem:[#allocation2] sm:$0xff] %v171
      %174 = vst [vmem:[#allocation2 + $0x38] sm:$0x3] %v172
      %v175 = vld [vmem:[%s165 + $0x1] sm:$0xff]
      %v176 = vld [vmem:[%s165 + $0x9] sm:$0x3]
      %177 = vst [vmem:[#allocation2 + $0x8] sm:$0xff] %v175
      %178 = vst [vmem:[#allocation2 + $0x40] sm:$0x3] %v176
      %v179 = vld [vmem:[%s165 + $0x2] sm:$0xff]
      %v180 = vld [vmem:[%s165 + $0xa] sm:$0x3]
      %181 = vst [vmem:[#allocation2 + $0x10] sm:$0xff] %v179
      %182 = vst [vmem:[#allocation2 + $0x48] sm:$0x3] %v180
      %v183 = vld [vmem:[%s165 + $0x3] sm:$0xff]
      %v184 = vld [vmem:[%s165 + $0xb] sm:$0x3]
      %185 = vst [vmem:[#allocation2 + $0x18] sm:$0xff] %v183
      %186 = vst [vmem:[#allocation2 + $0x50] sm:$0x3] %v184
      %v187 = vld [vmem:[%s165 + $0x4] sm:$0xff]
      %v188 = vld [vmem:[%s165 + $0xc] sm:$0x3]
      %189 = vst [vmem:[#allocation2 + $0x20] sm:$0xff] %v187
      %190 = vst [vmem:[#allocation2 + $0x58] sm:$0x3] %v188
      %v191 = vld [vmem:[%s165 + $0x5] sm:$0xff]
      %v192 = vld [vmem:[%s165 + $0xd] sm:$0x3]
      %193 = vst [vmem:[#allocation2 + $0x28] sm:$0xff] %v191
      %194 = vst [vmem:[#allocation2 + $0x60] sm:$0x3] %v192
      %v195 = vld [vmem:[%s165 + $0x6] sm:$0xff]
      %v196 = vld [vmem:[%s165 + $0xe] sm:$0x3]
      %197 = vst [vmem:[#allocation2 + $0x30] sm:$0xff] %v195
      %198 = vst [vmem:[#allocation2 + $0x68] sm:$0x3] %v196
      %v199 = vld [vmem:[#allocation2] sm:$0xff]
      %v200 = vld [vmem:[#allocation2 + $0x8] sm:$0xff]
      %v201 = vld [vmem:[#allocation2 + $0x10] sm:$0xff]
      %v202 = vld [vmem:[#allocation2 + $0x18] sm:$0xff]
      %v203 = vld [vmem:[#allocation2 + $0x20] sm:$0xff]
      %v204 = vld [vmem:[#allocation2 + $0x28] sm:$0xff]
      %v205 = vld [vmem:[#allocation2 + $0x30] sm:$0xff]
      %v206 = vld [vmem:[#allocation2 + $0x38] sm:$0x3]
      %v207 = vld [vmem:[#allocation2 + $0x40] sm:$0x3]
      %v208 = vld [vmem:[#allocation2 + $0x48] sm:$0x3]
      %v209 = vld [vmem:[#allocation2 + $0x50] sm:$0x3]
      %v210 = vld [vmem:[#allocation2 + $0x58] sm:$0x3]
      %v211 = vld [vmem:[#allocation2 + $0x60] sm:$0x3]
      %v212 = vld [vmem:[#allocation2 + $0x68] sm:$0x3]
      %v213 = vld [vmem:[%s1] sm:$0xff]
      %v214 = vld [vmem:[%s1 + $0x8] sm:$0xff]
      %v215 = vld [vmem:[%s1 + $0x10] sm:$0xff]
      %v216 = vld [vmem:[%s1 + $0x18] sm:$0xff]
      %v217 = vld [vmem:[%s1 + $0x20] sm:$0xff]
      %v218 = vld [vmem:[%s1 + $0x28] sm:$0xff]
      %v219 = vld [vmem:[%s1 + $0x30] sm:$0xff]
      %v220 = vld [vmem:[%s1 + $0x38] sm:$0xff]
      %v221 = vld [vmem:[%s1 + $0x40] sm:$0xff]
      %v222 = vld [vmem:[%s1 + $0x48] sm:$0xff]
      %v223 = vld [vmem:[%s1 + $0x50] sm:$0xff]
      %v224 = vld [vmem:[%s1 + $0x58] sm:$0xff]
      %v225 = vld [vmem:[%s1 + $0x60] sm:$0xff]
      %v226 = vld [vmem:[%s1 + $0x68] sm:$0xff]
      %v227 = vld [vmem:[%s1 + $0x70] sm:$0xff]
      %v228 = vld [vmem:[%s1 + $0x78] sm:$0xff]
      %v229 = vld [vmem:[%s1 + $0x80] sm:$0xff]
      %v230 = vld [vmem:[%s1 + $0x88] sm:$0xff]
      %v231 = vld [vmem:[%s1 + $0x90] sm:$0xff]
      %v232 = vld [vmem:[%s1 + $0x98] sm:$0xff]
      %v233 = vld [vmem:[%s1 + $0xa0] sm:$0xff]
      %v234 = vld [vmem:[%s1 + $0xa8] sm:$0xff]
      %v235 = vld [vmem:[%s1 + $0xb0] sm:$0xff]
      %v236 = vld [vmem:[%s1 + $0xb8] sm:$0xff]
      %v237 = vld [vmem:[%s1 + $0xc0] sm:$0xff]
      %v238 = vld [vmem:[%s1 + $0xc8] sm:$0xff]
      %v239 = vld [vmem:[%s1 + $0xd0] sm:$0xff]
      %v240 = vld [vmem:[%s1 + $0xd8] sm:$0xff]
      %v241 = vld [vmem:[%s1 + $0xe0] sm:$0xff]
      %v242 = vld [vmem:[%s1 + $0xe8] sm:$0xff]
      %v243 = vld [vmem:[%s1 + $0xf0] sm:$0xff]
      %v244 = vld [vmem:[%s1 + $0xf8] sm:$0xff]
      %v245 = vld [vmem:[%s1 + $0x100] sm:$0xff]
      %v246 = vld [vmem:[%s1 + $0x108] sm:$0xff]
      %v247 = vld [vmem:[%s1 + $0x110] sm:$0xff]
      %v248 = vld [vmem:[%s1 + $0x118] sm:$0xff]
      %v249 = vld [vmem:[%s1 + $0x120] sm:$0xff]
      %v250 = vld [vmem:[%s1 + $0x128] sm:$0xff]
      %v251 = vld [vmem:[%s1 + $0x130] sm:$0xff]
      %v252 = vld [vmem:[%s1 + $0x138] sm:$0xff]
      %v253 = vld [vmem:[%s1 + $0x140] sm:$0xff]
      %v254 = vld [vmem:[%s1 + $0x148] sm:$0xff]
      %v255 = vld [vmem:[%s1 + $0x150] sm:$0xff]
      %v256 = vld [vmem:[%s1 + $0x158] sm:$0xff]
      %v257 = vld [vmem:[%s1 + $0x160] sm:$0xff]
      %v258 = vld [vmem:[%s1 + $0x168] sm:$0xff]
      %v259 = vld [vmem:[%s1 + $0x170] sm:$0xff]
      %v260 = vld [vmem:[%s1 + $0x178] sm:$0xff]
      %v261 = vld [vmem:[%s1 + $0x180] sm:$0xff]
      %v262 = vld [vmem:[%s1 + $0x188] sm:$0xff]
      %v263 = vld [vmem:[%s1 + $0x190] sm:$0xff]
      %v264 = vld [vmem:[%s1 + $0x198] sm:$0xff]
      %v265 = vld [vmem:[%s1 + $0x1a0] sm:$0xff]
      %v266 = vld [vmem:[%s1 + $0x1a8] sm:$0xff]
      %v267 = vld [vmem:[%s1 + $0x1b0] sm:$0xff]
      %v268 = vld [vmem:[%s1 + $0x1b8] sm:$0xff]
      %v269 = vld [vmem:[%s1 + $0x1c0] sm:$0xff]
      %v270 = vld [vmem:[%s1 + $0x1c8] sm:$0xff]
      %v271 = vld [vmem:[%s1 + $0x1d0] sm:$0xff]
      %v272 = vld [vmem:[%s1 + $0x1d8] sm:$0xff]
      %v273 = vld [vmem:[%s1 + $0x1e0] sm:$0xff]
      %v274 = vld [vmem:[%s1 + $0x1e8] sm:$0xff]
      %v275 = vld [vmem:[%s1 + $0x1f0] sm:$0xff]
      %v276 = vld [vmem:[%s1 + $0x1f8] sm:$0xff]
      %v277 = vld [vmem:[%s1 + $0x200] sm:$0xff]
      %v278 = vld [vmem:[%s1 + $0x208] sm:$0xff]
      %v279 = vld [vmem:[%s1 + $0x210] sm:$0xff]
      %v280 = vld [vmem:[%s1 + $0x218] sm:$0xff]
      %v281 = vld [vmem:[%s1 + $0x220] sm:$0xff]
      %v282 = vld [vmem:[%s1 + $0x228] sm:$0xff]
      %v283 = vld [vmem:[%s1 + $0x230] sm:$0xff]
      %v284 = vld [vmem:[%s1 + $0x238] sm:$0xff]
      %v285 = vld [vmem:[%s1 + $0x240] sm:$0xff]
      %v286 = vld [vmem:[%s1 + $0x248] sm:$0xff]
      %v287 = vld [vmem:[%s1 + $0x250] sm:$0xff]
      %v288 = vld [vmem:[%s1 + $0x258] sm:$0xff]
      %v289 = vld [vmem:[%s1 + $0x260] sm:$0xff]
      %v290 = vld [vmem:[%s1 + $0x268] sm:$0xff]
      %v291 = vld [vmem:[%s1 + $0x270] sm:$0xff]
      %v292 = vld [vmem:[%s1 + $0x278] sm:$0xff]
      %v293 = vld [vmem:[%s1 + $0x280] sm:$0xff]
      %v294 = vld [vmem:[%s1 + $0x288] sm:$0xff]
      %v295 = vld [vmem:[%s1 + $0x290] sm:$0xff]
      %v296 = vld [vmem:[%s1 + $0x298] sm:$0xff]
      %v297 = vld [vmem:[%s1 + $0x2a0] sm:$0xff]
      %v298 = vld [vmem:[%s1 + $0x2a8] sm:$0xff]
      %v299 = vld [vmem:[%s1 + $0x2b0] sm:$0xff]
      %v300 = vld [vmem:[%s1 + $0x2b8] sm:$0xff]
      %v301 = vld [vmem:[%s1 + $0x2c0] sm:$0xff]
      %v302 = vld [vmem:[%s1 + $0x2c8] sm:$0xff]
      %v303 = vld [vmem:[%s1 + $0x2d0] sm:$0xff]
      %v304 = vld [vmem:[%s1 + $0x2d8] sm:$0xff]
      %v305 = vld [vmem:[%s1 + $0x2e0] sm:$0xff]
      %v306 = vld [vmem:[%s1 + $0x2e8] sm:$0xff]
      %v307 = vld [vmem:[%s1 + $0x2f0] sm:$0xff]
      %v308 = vld [vmem:[%s1 + $0x2f8] sm:$0xff]
      %v309 = vld [vmem:[%s1 + $0x300] sm:$0xff]
      %v310 = vld [vmem:[%s1 + $0x308] sm:$0xff]
      %v311 = vld [vmem:[%s1 + $0x310] sm:$0xff]
      %v312 = vld [vmem:[%s1 + $0x318] sm:$0xff]
      %v313 = vld [vmem:[%s1 + $0x320] sm:$0xff]
      %v314 = vld [vmem:[%s1 + $0x328] sm:$0xff]
      %v315 = vld [vmem:[%s1 + $0x330] sm:$0xff]
      %v316 = vld [vmem:[%s1 + $0x338] sm:$0xff]
      %v317 = vld [vmem:[%s1 + $0x340] sm:$0xff]
      %v318 = vld [vmem:[%s1 + $0x348] sm:$0xff]
      %v319 = vld [vmem:[%s1 + $0x350] sm:$0xff]
      %v320 = vld [vmem:[%s1 + $0x358] sm:$0xff]
      %v321 = vld [vmem:[%s1 + $0x360] sm:$0xff]
      %v322 = vld [vmem:[%s1 + $0x368] sm:$0xff]
      %v323 = vld [vmem:[%s1 + $0x370] sm:$0xff]
      %v324 = vld [vmem:[%s1 + $0x378] sm:$0xff]
      %v325 = vld [vmem:[%s1 + $0x380] sm:$0xff]
      %v326 = vld [vmem:[%s1 + $0x388] sm:$0xff]
      %v327 = vld [vmem:[%s1 + $0x390] sm:$0xff]
      %v328 = vld [vmem:[%s1 + $0x398] sm:$0xff]
      %v329 = vld [vmem:[%s1 + $0x3a0] sm:$0xff]
      %v330 = vld [vmem:[%s1 + $0x3a8] sm:$0xff]
      %v331 = vld [vmem:[%s1 + $0x3b0] sm:$0xff]
      %v332 = vld [vmem:[%s1 + $0x3b8] sm:$0xff]
      %v333 = vld [vmem:[%s1 + $0x3c0] sm:$0xff]
      %v334 = vld [vmem:[%s1 + $0x3c8] sm:$0xff]
      %v335 = vld [vmem:[%s1 + $0x3d0] sm:$0xff]
      %v336 = vld [vmem:[%s1 + $0x3d8] sm:$0xff]
      %v337 = vld [vmem:[%s1 + $0x3e0] sm:$0xff]
      %v338 = vld [vmem:[%s1 + $0x3e8] sm:$0xff]
      %v339 = vld [vmem:[%s1 + $0x3f0] sm:$0xff]
      %v340 = vld [vmem:[%s1 + $0x3f8] sm:$0xff]
      %v341 = vld [vmem:[%s1 + $0x400] sm:$0xff]
      %v342 = vld [vmem:[%s1 + $0x408] sm:$0xff]
      %v343 = vld [vmem:[%s1 + $0x410] sm:$0xff]
      %v344 = vld [vmem:[%s1 + $0x418] sm:$0xff]
      %v345 = vld [vmem:[%s1 + $0x420] sm:$0xff]
      %v346 = vld [vmem:[%s1 + $0x428] sm:$0xff]
      %v347 = vld [vmem:[%s1 + $0x430] sm:$0xff]
      %v348 = vld [vmem:[%s1 + $0x438] sm:$0xff]
      %v349 = vld [vmem:[%s1 + $0x440] sm:$0xff]
      %v350 = vld [vmem:[%s1 + $0x448] sm:$0xff]
      %v351 = vld [vmem:[%s1 + $0x450] sm:$0xff]
      %v352 = vld [vmem:[%s1 + $0x458] sm:$0xff]
      %v353 = vld [vmem:[%s1 + $0x460] sm:$0xff]
      %v354 = vld [vmem:[%s1 + $0x468] sm:$0xff]
      %v355 = vld [vmem:[%s1 + $0x470] sm:$0xff]
      %v356 = vld [vmem:[%s1 + $0x478] sm:$0xff]
      %v357 = vld [vmem:[%s1 + $0x480] sm:$0xff]
      %v358 = vld [vmem:[%s1 + $0x488] sm:$0xff]
      %v359 = vld [vmem:[%s1 + $0x490] sm:$0xff]
      %v360 = vld [vmem:[%s1 + $0x498] sm:$0xff]
      %v361 = vld [vmem:[%s1 + $0x4a0] sm:$0xff]
      %v362 = vld [vmem:[%s1 + $0x4a8] sm:$0xff]
      %v363 = vld [vmem:[%s1 + $0x4b0] sm:$0xff]
      %v364 = vld [vmem:[%s1 + $0x4b8] sm:$0xff]
      %v365 = vld [vmem:[%s1 + $0x4c0] sm:$0xff]
      %v366 = vld [vmem:[%s1 + $0x4c8] sm:$0xff]
      %v367 = vld [vmem:[%s1 + $0x4d0] sm:$0xff]
      %v368 = vld [vmem:[%s1 + $0x4d8] sm:$0xff]
      %v369 = vld [vmem:[%s1 + $0x4e0] sm:$0xff]
      %v370 = vld [vmem:[%s1 + $0x4e8] sm:$0xff]
      %v371 = vld [vmem:[%s1 + $0x4f0] sm:$0xff]
      %v372 = vld [vmem:[%s1 + $0x4f8] sm:$0xff]
      %v373 = vld [vmem:[%s1 + $0x500] sm:$0xff]
      %v374 = vld [vmem:[%s1 + $0x508] sm:$0xff]
      %v375 = vld [vmem:[%s1 + $0x510] sm:$0xff]
      %v376 = vld [vmem:[%s1 + $0x518] sm:$0xff]
      %v377 = vld [vmem:[%s1 + $0x520] sm:$0xff]
      %v378 = vld [vmem:[%s1 + $0x528] sm:$0xff]
      %v379 = vld [vmem:[%s1 + $0x530] sm:$0xff]
      %v380 = vld [vmem:[%s1 + $0x538] sm:$0xff]
      %v381 = vld [vmem:[%s1 + $0x540] sm:$0xff]
      %v382 = vld [vmem:[%s1 + $0x548] sm:$0xff]
      %v383 = vld [vmem:[%s1 + $0x550] sm:$0xff]
      %v384 = vld [vmem:[%s1 + $0x558] sm:$0xff]
      %v385 = vld [vmem:[%s1 + $0x560] sm:$0xff]
      %v386 = vld [vmem:[%s1 + $0x568] sm:$0xff]
      %v387 = vld [vmem:[%s1 + $0x570] sm:$0xff]
      %v388 = vld [vmem:[%s1 + $0x578] sm:$0xff]
      %v389 = vld [vmem:[%s1 + $0x580] sm:$0xff]
      %v390 = vld [vmem:[%s1 + $0x588] sm:$0xff]
      %v391 = vld [vmem:[%s1 + $0x590] sm:$0xff]
      %v392 = vld [vmem:[%s1 + $0x598] sm:$0xff]
      %v393 = vld [vmem:[%s1 + $0x5a0] sm:$0xff]
      %v394 = vld [vmem:[%s1 + $0x5a8] sm:$0xff]
      %v395 = vld [vmem:[%s1 + $0x5b0] sm:$0xff]
      %v396 = vld [vmem:[%s1 + $0x5b8] sm:$0xff]
      %v397 = vld [vmem:[%s1 + $0x5c0] sm:$0xff]
      %v398 = vld [vmem:[%s1 + $0x5c8] sm:$0xff]
      %v399 = vld [vmem:[%s1 + $0x5d0] sm:$0xff]
      %v400 = vld [vmem:[%s1 + $0x5d8] sm:$0xff]
      %v401 = vld [vmem:[%s1 + $0x5e0] sm:$0xff]
      %v402 = vld [vmem:[%s1 + $0x5e8] sm:$0xff]
      %v403 = vld [vmem:[%s1 + $0x5f0] sm:$0xff]
      %v404 = vld [vmem:[%s1 + $0x5f8] sm:$0xff]
      %v405 = vld [vmem:[%s1 + $0x600] sm:$0xff]
      %v406 = vld [vmem:[%s1 + $0x608] sm:$0xff]
      %v407 = vld [vmem:[%s1 + $0x610] sm:$0xff]
      %v408 = vld [vmem:[%s1 + $0x618] sm:$0xff]
      %v409 = vld [vmem:[%s1 + $0x620] sm:$0xff]
      %v410 = vld [vmem:[%s1 + $0x628] sm:$0xff]
      %v411 = vld [vmem:[%s1 + $0x630] sm:$0xff]
      %v412 = vld [vmem:[%s1 + $0x638] sm:$0xff]
      %v413 = vld [vmem:[%s1 + $0x640] sm:$0xff]
      %v414 = vld [vmem:[%s1 + $0x648] sm:$0xff]
      %v415 = vld [vmem:[%s1 + $0x650] sm:$0xff]
      %v416 = vld [vmem:[%s1 + $0x658] sm:$0xff]
      %v417 = vld [vmem:[%s1 + $0x660] sm:$0xff]
      %v418 = vld [vmem:[%s1 + $0x668] sm:$0xff]
      %v419 = vld [vmem:[%s1 + $0x670] sm:$0xff]
      %v420 = vld [vmem:[%s1 + $0x678] sm:$0xff]
      %v421 = vld [vmem:[%s1 + $0x680] sm:$0xff]
      %v422 = vld [vmem:[%s1 + $0x688] sm:$0xff]
      %v423 = vld [vmem:[%s1 + $0x690] sm:$0xff]
      %v424 = vld [vmem:[%s1 + $0x698] sm:$0xff]
      %v425 = vld [vmem:[%s1 + $0x6a0] sm:$0xff]
      %v426 = vld [vmem:[%s1 + $0x6a8] sm:$0xff]
      %v427 = vld [vmem:[%s1 + $0x6b0] sm:$0xff]
      %v428 = vld [vmem:[%s1 + $0x6b8] sm:$0xff]
      %v429 = vld [vmem:[%s1 + $0x6c0] sm:$0xff]
      %v430 = vld [vmem:[%s1 + $0x6c8] sm:$0xff]
      %v431 = vld [vmem:[%s1 + $0x6d0] sm:$0xff]
      %v432 = vld [vmem:[%s1 + $0x6d8] sm:$0xff]
      %v433 = vld [vmem:[%s1 + $0x6e0] sm:$0xff]
      %v434 = vld [vmem:[%s1 + $0x6e8] sm:$0xff]
      %v435 = vld [vmem:[%s1 + $0x6f0] sm:$0xff]
      %v436 = vld [vmem:[%s1 + $0x6f8] sm:$0xff]
      %v437 = vld [vmem:[%s2] sm:$0x3]
      %v439 = vlaneseq
      %v440 = vshrl.u32 %v439, 7
      %v441 = vsub.s32 0, %v440
      %v442 = vrot.slane %v437, %v441
      %v443 = vlaneseq
      %v444 = vshrl.u32 %v443, 7
      %v445 = vsub.s32 1, %v444
      %v446 = vrot.slane %v437, %v445
      %449 = vmatprep.subr.mxu0 %v244
      %450 = vmatpush1.msra.mxu0 %v243
      %451 = vmatprep.subr.mxu0 %v242
      %452 = vmatpush1.msra.mxu0 %v241
      %453 = vmatprep.subr.mxu0 %v240
      %454 = vmatpush1.msra.mxu0 %v239
      %455 = vmatprep.subr.mxu0 %v238
      %456 = vmatpush1.msra.mxu0 %v237
      %457 = vmatprep.subr.mxu0 %v236
      %458 = vmatpush1.msra.mxu0 %v235
      %459 = vmatprep.subr.mxu0 %v234
      %460 = vmatpush1.msra.mxu0 %v233
      %461 = vmatprep.subr.mxu0 %v232
      %462 = vmatpush1.msra.mxu0 %v231
      %463 = vmatprep.subr.mxu0 %v230
      %464 = vmatpush1.msra.mxu0 %v229
      %465 = vmatprep.subr.mxu0 %v228
      %466 = vmatpush1.msra.mxu0 %v227
      %467 = vmatprep.subr.mxu0 %v226
      %468 = vmatpush1.msra.mxu0 %v225
      %469 = vmatprep.subr.mxu0 %v224
      %470 = vmatpush1.msra.mxu0 %v223
      %471 = vmatprep.subr.mxu0 %v222
      %472 = vmatpush1.msra.mxu0 %v221
      %473 = vmatprep.subr.mxu0 %v220
      %474 = vmatpush1.msra.mxu0 %v219
      %475 = vmatprep.subr.mxu0 %v218
      %476 = vmatpush1.msra.mxu0 %v217
      %477 = vmatprep.subr.mxu0 %v216
      %478 = vmatpush1.msra.mxu0 %v215
      %479 = vmatprep.subr.mxu0 %v214
      %480 = vmatpush1.msra.mxu0 %v213
      %481 = vmatprep.subr.mxu0 %v276
      %482 = vmatpush2.msra.mxu0 %v275
      %483 = vmatprep.subr.mxu0 %v274
      %484 = vmatpush2.msra.mxu0 %v273
      %485 = vmatprep.subr.mxu0 %v272
      %486 = vmatpush2.msra.mxu0 %v271
      %487 = vmatprep.subr.mxu0 %v270
      %488 = vmatpush2.msra.mxu0 %v269
      %489 = vmatprep.subr.mxu0 %v268
      %490 = vmatpush2.msra.mxu0 %v267
      %491 = vmatprep.subr.mxu0 %v266
      %492 = vmatpush2.msra.mxu0 %v265
      %493 = vmatprep.subr.mxu0 %v264
      %494 = vmatpush2.msra.mxu0 %v263
      %495 = vmatprep.subr.mxu0 %v262
      %496 = vmatpush2.msra.mxu0 %v261
      %497 = vmatprep.subr.mxu0 %v260
      %498 = vmatpush2.msra.mxu0 %v259
      %499 = vmatprep.subr.mxu0 %v258
      %500 = vmatpush2.msra.mxu0 %v257
      %501 = vmatprep.subr.mxu0 %v256
      %502 = vmatpush2.msra.mxu0 %v255
      %503 = vmatprep.subr.mxu0 %v254
      %504 = vmatpush2.msra.mxu0 %v253
      %505 = vmatprep.subr.mxu0 %v252
      %506 = vmatpush2.msra.mxu0 %v251
      %507 = vmatprep.subr.mxu0 %v250
      %508 = vmatpush2.msra.mxu0 %v249
      %509 = vmatprep.subr.mxu0 %v248
      %510 = vmatpush2.msra.mxu0 %v247
      %511 = vmatprep.subr.mxu0 %v246
      %512 = vmatpush2.msra.mxu0 %v245
      %513 = vmatprep.mubr.f32.mxu0 %v200
      %514 = vmatmul.mubr.f32.gmra.mxu0 %v199
      %v515 = vpop.f32.mrf.mxu0
      %v516 = vadd.f32 %v442, %v515
      %v517 = vpop.f32.mrf.mxu0
      %v518 = vadd.f32 %v446, %v517
      %519 = vmatprep.mubr.f32.mxu0 %v207
      %520 = vmatmul.mubr.f32.gmra.mxu0 %v206
      %v521 = vpop.f32.mrf.mxu0
      %v522 = vadd.f32 %v442, %v521
      %v523 = vpop.f32.mrf.mxu0
      %v524 = vadd.f32 %v446, %v523
      %525 = vdwg.mxu0
      %526 = vmatprep.subr.mxu0 %v308
      %527 = vmatpush1.msra.mxu0 %v307
      %528 = vmatprep.subr.mxu0 %v306
      %529 = vmatpush1.msra.mxu0 %v305
      %530 = vmatprep.subr.mxu0 %v304
      %531 = vmatpush1.msra.mxu0 %v303
      %532 = vmatprep.subr.mxu0 %v302
      %533 = vmatpush1.msra.mxu0 %v301
      %534 = vmatprep.subr.mxu0 %v300
      %535 = vmatpush1.msra.mxu0 %v299
      %536 = vmatprep.subr.mxu0 %v298
      %537 = vmatpush1.msra.mxu0 %v297
      %538 = vmatprep.subr.mxu0 %v296
      %539 = vmatpush1.msra.mxu0 %v295
      %540 = vmatprep.subr.mxu0 %v294
      %541 = vmatpush1.msra.mxu0 %v293
      %542 = vmatprep.subr.mxu0 %v292
      %543 = vmatpush1.msra.mxu0 %v291
      %544 = vmatprep.subr.mxu0 %v290
      %545 = vmatpush1.msra.mxu0 %v289
      %546 = vmatprep.subr.mxu0 %v288
      %547 = vmatpush1.msra.mxu0 %v287
      %548 = vmatprep.subr.mxu0 %v286
      %549 = vmatpush1.msra.mxu0 %v285
      %550 = vmatprep.subr.mxu0 %v284
      %551 = vmatpush1.msra.mxu0 %v283
      %552 = vmatprep.subr.mxu0 %v282
      %553 = vmatpush1.msra.mxu0 %v281
      %554 = vmatprep.subr.mxu0 %v280
      %555 = vmatpush1.msra.mxu0 %v279
      %556 = vmatprep.subr.mxu0 %v278
      %557 = vmatpush1.msra.mxu0 %v277
      %558 = vmatprep.subr.mxu0 %v340
      %559 = vmatpush2.msra.mxu0 %v339
      %560 = vmatprep.subr.mxu0 %v338
      %561 = vmatpush2.msra.mxu0 %v337
      %562 = vmatprep.subr.mxu0 %v336
      %563 = vmatpush2.msra.mxu0 %v335
      %564 = vmatprep.subr.mxu0 %v334
      %565 = vmatpush2.msra.mxu0 %v333
      %566 = vmatprep.subr.mxu0 %v332
      %567 = vmatpush2.msra.mxu0 %v331
      %568 = vmatprep.subr.mxu0 %v330
      %569 = vmatpush2.msra.mxu0 %v329
      %570 = vmatprep.subr.mxu0 %v328
      %571 = vmatpush2.msra.mxu0 %v327
      %572 = vmatprep.subr.mxu0 %v326
      %573 = vmatpush2.msra.mxu0 %v325
      %574 = vmatprep.subr.mxu0 %v324
      %575 = vmatpush2.msra.mxu0 %v323
      %576 = vmatprep.subr.mxu0 %v322
      %577 = vmatpush2.msra.mxu0 %v321
      %578 = vmatprep.subr.mxu0 %v320
      %579 = vmatpush2.msra.mxu0 %v319
      %580 = vmatprep.subr.mxu0 %v318
      %581 = vmatpush2.msra.mxu0 %v317
      %582 = vmatprep.subr.mxu0 %v316
      %583 = vmatpush2.msra.mxu0 %v315
      %584 = vmatprep.subr.mxu0 %v314
      %585 = vmatpush2.msra.mxu0 %v313
      %586 = vmatprep.subr.mxu0 %v312
      %587 = vmatpush2.msra.mxu0 %v311
      %588 = vmatprep.subr.mxu0 %v310
      %589 = vmatpush2.msra.mxu0 %v309
      %590 = vmatprep.mubr.f32.mxu0 %v202
      %591 = vmatmul.mubr.f32.gmra.mxu0 %v201
      %v592 = vpop.f32.mrf.mxu0
      %v593 = vadd.f32 %v516, %v592
      %v594 = vpop.f32.mrf.mxu0
      %v595 = vadd.f32 %v518, %v594
      %596 = vmatprep.mubr.f32.mxu0 %v209
      %597 = vmatmul.mubr.f32.gmra.mxu0 %v208
      %v598 = vpop.f32.mrf.mxu0
      %v599 = vadd.f32 %v522, %v598
      %v600 = vpop.f32.mrf.mxu0
      %v601 = vadd.f32 %v524, %v600
      %602 = vdwg.mxu0
      %603 = vmatprep.subr.mxu0 %v372
      %604 = vmatpush1.msra.mxu0 %v371
      %605 = vmatprep.subr.mxu0 %v370
      %606 = vmatpush1.msra.mxu0 %v369
      %607 = vmatprep.subr.mxu0 %v368
      %608 = vmatpush1.msra.mxu0 %v367
      %609 = vmatprep.subr.mxu0 %v366
      %610 = vmatpush1.msra.mxu0 %v365
      %611 = vmatprep.subr.mxu0 %v364
      %612 = vmatpush1.msra.mxu0 %v363
      %613 = vmatprep.subr.mxu0 %v362
      %614 = vmatpush1.msra.mxu0 %v361
      %615 = vmatprep.subr.mxu0 %v360
      %616 = vmatpush1.msra.mxu0 %v359
      %617 = vmatprep.subr.mxu0 %v358
      %618 = vmatpush1.msra.mxu0 %v357
      %619 = vmatprep.subr.mxu0 %v356
      %620 = vmatpush1.msra.mxu0 %v355
      %621 = vmatprep.subr.mxu0 %v354
      %622 = vmatpush1.msra.mxu0 %v353
      %623 = vmatprep.subr.mxu0 %v352
      %624 = vmatpush1.msra.mxu0 %v351
      %625 = vmatprep.subr.mxu0 %v350
      %626 = vmatpush1.msra.mxu0 %v349
      %627 = vmatprep.subr.mxu0 %v348
      %628 = vmatpush1.msra.mxu0 %v347
      %629 = vmatprep.subr.mxu0 %v346
      %630 = vmatpush1.msra.mxu0 %v345
      %631 = vmatprep.subr.mxu0 %v344
      %632 = vmatpush1.msra.mxu0 %v343
      %633 = vmatprep.subr.mxu0 %v342
      %634 = vmatpush1.msra.mxu0 %v341
      %635 = vmatprep.subr.mxu0 %v404
      %636 = vmatpush2.msra.mxu0 %v403
      %637 = vmatprep.subr.mxu0 %v402
      %638 = vmatpush2.msra.mxu0 %v401
      %639 = vmatprep.subr.mxu0 %v400
      %640 = vmatpush2.msra.mxu0 %v399
      %641 = vmatprep.subr.mxu0 %v398
      %642 = vmatpush2.msra.mxu0 %v397
      %643 = vmatprep.subr.mxu0 %v396
      %644 = vmatpush2.msra.mxu0 %v395
      %645 = vmatprep.subr.mxu0 %v394
      %646 = vmatpush2.msra.mxu0 %v393
      %647 = vmatprep.subr.mxu0 %v392
      %648 = vmatpush2.msra.mxu0 %v391
      %649 = vmatprep.subr.mxu0 %v390
      %650 = vmatpush2.msra.mxu0 %v389
      %651 = vmatprep.subr.mxu0 %v388
      %652 = vmatpush2.msra.mxu0 %v387
      %653 = vmatprep.subr.mxu0 %v386
      %654 = vmatpush2.msra.mxu0 %v385
      %655 = vmatprep.subr.mxu0 %v384
      %656 = vmatpush2.msra.mxu0 %v383
      %657 = vmatprep.subr.mxu0 %v382
      %658 = vmatpush2.msra.mxu0 %v381
      %659 = vmatprep.subr.mxu0 %v380
      %660 = vmatpush2.msra.mxu0 %v379
      %661 = vmatprep.subr.mxu0 %v378
      %662 = vmatpush2.msra.mxu0 %v377
      %663 = vmatprep.subr.mxu0 %v376
      %664 = vmatpush2.msra.mxu0 %v375
      %665 = vmatprep.subr.mxu0 %v374
      %666 = vmatpush2.msra.mxu0 %v373
      %667 = vmatprep.mubr.f32.mxu0 %v204
      %668 = vmatmul.mubr.f32.gmra.mxu0 %v203
      %v669 = vpop.f32.mrf.mxu0
      %v670 = vadd.f32 %v593, %v669
      %v671 = vpop.f32.mrf.mxu0
      %v672 = vadd.f32 %v595, %v671
      %673 = vmatprep.mubr.f32.mxu0 %v211
      %674 = vmatmul.mubr.f32.gmra.mxu0 %v210
      %v675 = vpop.f32.mrf.mxu0
      %v676 = vadd.f32 %v599, %v675
      %v677 = vpop.f32.mrf.mxu0
      %v678 = vadd.f32 %v601, %v677
      %679 = vdwg.mxu0
      %680 = vmatprep.subr.mxu0 %v436
      %681 = vmatpush1.msra.mxu0 %v435
      %682 = vmatprep.subr.mxu0 %v434
      %683 = vmatpush1.msra.mxu0 %v433
      %684 = vmatprep.subr.mxu0 %v432
      %685 = vmatpush1.msra.mxu0 %v431
      %686 = vmatprep.subr.mxu0 %v430
      %687 = vmatpush1.msra.mxu0 %v429
      %688 = vmatprep.subr.mxu0 %v428
      %689 = vmatpush1.msra.mxu0 %v427
      %690 = vmatprep.subr.mxu0 %v426
      %691 = vmatpush1.msra.mxu0 %v425
      %692 = vmatprep.subr.mxu0 %v424
      %693 = vmatpush1.msra.mxu0 %v423
      %694 = vmatprep.subr.mxu0 %v422
      %695 = vmatpush1.msra.mxu0 %v421
      %696 = vmatprep.subr.mxu0 %v420
      %697 = vmatpush1.msra.mxu0 %v419
      %698 = vmatprep.subr.mxu0 %v418
      %699 = vmatpush1.msra.mxu0 %v417
      %700 = vmatprep.subr.mxu0 %v416
      %701 = vmatpush1.msra.mxu0 %v415
      %702 = vmatprep.subr.mxu0 %v414
      %703 = vmatpush1.msra.mxu0 %v413
      %704 = vmatprep.subr.mxu0 %v412
      %705 = vmatpush1.msra.mxu0 %v411
      %706 = vmatprep.subr.mxu0 %v410
      %707 = vmatpush1.msra.mxu0 %v409
      %708 = vmatprep.subr.mxu0 %v408
      %709 = vmatpush1.msra.mxu0 %v407
      %710 = vmatprep.subr.mxu0 %v406
      %711 = vmatpush1.msra.mxu0 %v405
      %712 = vmatprep.subr.mxu0 0.0
      %713 = vmatpush2.msra.mxu0 0.0
      %714 = vmatprep.subr.mxu0 0.0
      %715 = vmatpush2.msra.mxu0 0.0
      %716 = vmatprep.subr.mxu0 0.0
      %717 = vmatpush2.msra.mxu0 0.0
      %718 = vmatprep.subr.mxu0 0.0
      %719 = vmatpush2.msra.mxu0 0.0
      %720 = vmatprep.subr.mxu0 0.0
      %721 = vmatpush2.msra.mxu0 0.0
      %722 = vmatprep.subr.mxu0 0.0
      %723 = vmatpush2.msra.mxu0 0.0
      %724 = vmatprep.subr.mxu0 0.0
      %725 = vmatpush2.msra.mxu0 0.0
      %726 = vmatprep.subr.mxu0 0.0
      %727 = vmatpush2.msra.mxu0 0.0
      %728 = vmatprep.subr.mxu0 0.0
      %729 = vmatpush2.msra.mxu0 0.0
      %730 = vmatprep.subr.mxu0 0.0
      %731 = vmatpush2.msra.mxu0 0.0
      %732 = vmatprep.subr.mxu0 0.0
      %733 = vmatpush2.msra.mxu0 0.0
      %734 = vmatprep.subr.mxu0 0.0
      %735 = vmatpush2.msra.mxu0 0.0
      %736 = vmatprep.subr.mxu0 0.0
      %737 = vmatpush2.msra.mxu0 0.0
      %738 = vmatprep.subr.mxu0 0.0
      %739 = vmatpush2.msra.mxu0 0.0
      %740 = vmatprep.subr.mxu0 0.0
      %741 = vmatpush2.msra.mxu0 0.0
      %742 = vmatprep.subr.mxu0 0.0
      %743 = vmatpush2.msra.mxu0 0.0
      %744 = vmatprep.mubr.f32.mxu0 0.0
      %745 = vmatmul.mubr.f32.gmra.mxu0 %v205
      %v746 = vpop.f32.mrf.mxu0
      %v747 = vadd.f32 %v670, %v746
      %v748 = vpop.f32.mrf.mxu0
      %v749 = vadd.f32 %v672, %v748
      %750 = vmatprep.mubr.f32.mxu0 0.0
      %751 = vmatmul.mubr.f32.gmra.mxu0 %v212
      %v752 = vpop.f32.mrf.mxu0
      %v753 = vadd.f32 %v676, %v752
      %v754 = vpop.f32.mrf.mxu0
      %v755 = vadd.f32 %v678, %v754
      %756 = vdwg.mxu0
      %757 = vst [vmem:[%s170] sm:$0xff] %v747
      %vm758 = vcmask 261120
      %759 = vst.msk [vmem:[%s170 + $0x8] sm:$0xff] %vm758, %v749
      %760 = vst [vmem:[%s170 + $0x10] sm:$0x3] %v753
      %vm761 = vcmask 254976
      %762 = vst.msk [vmem:[%s170 + $0x18] sm:$0x3] %vm761, %v755
      %p763 = scmp.lt.s32.totalorder %s14, 1
      %s764 = scalar_select %p763, %s14, 1
      %s765 = smul.addr %s764, 4
      %s766 = smul.addr %s765, 8
      %s767 = scalar_lea.vmem %s3, %s766
      // Predicated region
      $region33: #{conv2dnet_forward.1} parent=31 // pred_check
        %p768 = pneg %p100
      $region34: #{conv2dnet_forward.1} parent=31 // pred_check_branch
        %770 = sbr.rel (%p768) target = $region36
      $region35: #{conv2dnet_forward.1} parent=31 // pred_region
        _
      $region36: #{conv2dnet_forward.1} parent=31 // pred_fallthru
        _
    $region32: #{conv2dnet_forward.1} parent=5 // pred_fallthru
      _
    %p771 = scmp.le.s32.totalorder 2, %s9
    // Predicated region
    $region37: #{conv2dnet_forward.1} parent=5 // pred_check
      %p772 = pneg %p771
    $region38: #{conv2dnet_forward.1} parent=5 // pred_check_branch
      %774 = sbr.rel (%p772) target = $region40
    $region39: #{conv2dnet_forward.1} parent=5 // pred_region
      %s775 = ssub.s32 %s9, 2
      // Predicated region
      $region41: #{conv2dnet_forward.1} parent=39 // pred_check
        %p776 = pneg %p106
      $region42: #{conv2dnet_forward.1} parent=39 // pred_check_branch
        %778 = sbr.rel (%p776) target = $region44
      $region43: #{conv2dnet_forward.1} parent=39 // pred_region
        %p779 = scmp.lt.s32.totalorder %s15, 1
        %s780 = scalar_select %p779, %s15, 1
        %s781 = smul.addr %s780, 4
        %s782 = smul.addr %s781, 8
        %s783 = scalar_lea.vmem %s3, %s782
      $region44: #{conv2dnet_forward.1} parent=39 // pred_fallthru
        _
    $region40: #{conv2dnet_forward.1} parent=5 // pred_fallthru
      _
  $region6: #{conv2dnet_forward.1} parent=0 // loop_footer
    %s13 = sadd.s32 1, %s9
  $region7: #{conv2dnet_forward.1} parent=0 // loop_footer_branch
    %8 = sbr.rel target = $region3
  $region8: #{conv2dnet_forward.1} parent=0 // loop_exit
    _

</llo_original>
